<compile_context>
chip_gen: v5e
topology: v5e:2x2
jax: 0.10.0
libtpu: 0.0.40
codegen_flags: <defaults>
</compile_context>

<pallas_src>
import functools

import jax
import jax.numpy as jnp
from jax import lax
from jax.experimental import pallas as pl
from jax.experimental.pallas import tpu as pltpu

EPS = 1e-5
SLOPE = 0.2
LANE = 128


def _round_up(x, m):
    return (x + m - 1) // m * m


def _lrelu(x):
    return jnp.where(x >= 0, x, SLOPE * x)


def _chip_budget():
    """(vmem_limit_bytes, matmul row-tile cap) chosen per TPU generation."""
    try:
        cap = int(pltpu.get_tpu_info().vmem_capacity_bytes)
    except Exception:
        cap = 128 * 1024 * 1024
    if cap >= 128 * 1024 * 1024:          # v5e / v6e: 128 MiB physical VMEM
        return 64 * 1024 * 1024, 1024
    return 32 * 1024 * 1024, 512          # v7x: 64 MiB physical VMEM


def _largest_tile(mp, tm, row_cap):
    """Largest multiple of tm that divides mp and is <= row_cap."""
    nt = mp // tm
    best = 1
    for d in range(1, nt + 1):
        if nt % d == 0 and d * tm <= row_cap:
            best = d
    return best * tm


# ---------------------------------------------------------------------------
# Pallas kernels
# ---------------------------------------------------------------------------
def conv1_shortcut_kernel(p_ref, w1_ref, ws_ref, y1_ref, ys_ref, s1_ref, ss_ref):
    """One M-tile: conv1 and shortcut matmuls share the resident patch tile.

    Stores bf16 results and a per-tile (1, 2, C) [sum; sumsq] partial for
    each branch (summed on the host -> batch-stat BN)."""
    p = p_ref[...]

    y1 = jnp.dot(p, w1_ref[...], preferred_element_type=jnp.float32)
    y1_ref[...] = y1.astype(y1_ref.dtype)
    s1_ref[...] = jnp.concatenate(
        [jnp.sum(y1, axis=0, keepdims=True),
         jnp.sum(y1 * y1, axis=0, keepdims=True)], axis=0)[None]

    ys = jnp.dot(p, ws_ref[...], preferred_element_type=jnp.float32)
    ys_ref[...] = ys.astype(ys_ref.dtype)
    ss_ref[...] = jnp.concatenate(
        [jnp.sum(ys, axis=0, keepdims=True),
         jnp.sum(ys * ys, axis=0, keepdims=True)], axis=0)[None]


def conv2_stats_kernel(p_ref, w_ref, y_ref, s_ref):
    """One M-tile of conv2 (patches @ weights) + per-tile stat partial."""
    y = jnp.dot(p_ref[...], w_ref[...], preferred_element_type=jnp.float32)
    y_ref[...] = y.astype(y_ref.dtype)
    s_ref[...] = jnp.concatenate(
        [jnp.sum(y, axis=0, keepdims=True),
         jnp.sum(y * y, axis=0, keepdims=True)], axis=0)[None]


def finalize_kernel(y2_ref, ys_ref, aff_ref, o_ref, *, act):
    """Folded BN affine per branch, optional LeakyReLU, residual add."""
    branch = y2_ref[...].astype(jnp.float32) * aff_ref[0:1, :] + aff_ref[1:2, :]
    short = ys_ref[...].astype(jnp.float32) * aff_ref[2:3, :] + aff_ref[3:4, :]
    if act:
        branch = _lrelu(branch)
        short = _lrelu(short)
    o_ref[...] = branch + short


# ---------------------------------------------------------------------------
# pallas_call wrappers
# ---------------------------------------------------------------------------
def _pass1_call(p1, w1, ws, tm, vmem_limit):
    mp, kp = p1.shape
    c1p = w1.shape[1]
    cp = ws.shape[1]
    nt = mp // tm
    cost = pl.CostEstimate(
        flops=2 * mp * kp * (c1p + cp), transcendentals=0,
        bytes_accessed=(mp * kp * 2 + kp * (c1p + cp) * 2
                        + mp * (c1p + cp) * 2 + nt * 2 * (c1p + cp) * 4))
    return pl.pallas_call(
        conv1_shortcut_kernel,
        out_shape=(jax.ShapeDtypeStruct((mp, c1p), jnp.bfloat16),
                   jax.ShapeDtypeStruct((mp, cp), jnp.bfloat16),
                   jax.ShapeDtypeStruct((nt, 2, c1p), jnp.float32),
                   jax.ShapeDtypeStruct((nt, 2, cp), jnp.float32)),
        grid=(nt,),
        in_specs=[pl.BlockSpec((tm, kp), lambda i: (i, 0)),
                  pl.BlockSpec((kp, c1p), lambda i: (0, 0)),
                  pl.BlockSpec((kp, cp), lambda i: (0, 0))],
        out_specs=(pl.BlockSpec((tm, c1p), lambda i: (i, 0)),
                   pl.BlockSpec((tm, cp), lambda i: (i, 0)),
                   pl.BlockSpec((1, 2, c1p), lambda i: (i, 0, 0)),
                   pl.BlockSpec((1, 2, cp), lambda i: (i, 0, 0))),
        compiler_params=pltpu.CompilerParams(
            dimension_semantics=("parallel",),     # no cross-tile dependency
            vmem_limit_bytes=vmem_limit),
        cost_estimate=cost,
    )(p1, w1, ws)


def _pass2_call(p2, w2, tm, vmem_limit):
    mp, kp = p2.shape
    cp = w2.shape[1]
    nt = mp // tm
    cost = pl.CostEstimate(
        flops=2 * mp * kp * cp, transcendentals=0,
        bytes_accessed=mp * kp * 2 + kp * cp * 2 + mp * cp * 2 + nt * 2 * cp * 4)
    return pl.pallas_call(
        conv2_stats_kernel,
        out_shape=(jax.ShapeDtypeStruct((mp, cp), jnp.bfloat16),
                   jax.ShapeDtypeStruct((nt, 2, cp), jnp.float32)),
        grid=(nt,),
        in_specs=[pl.BlockSpec((tm, kp), lambda i: (i, 0)),
                  pl.BlockSpec((kp, cp), lambda i: (0, 0))],
        out_specs=(pl.BlockSpec((tm, cp), lambda i: (i, 0)),
                   pl.BlockSpec((1, 2, cp), lambda i: (i, 0, 0))),
        compiler_params=pltpu.CompilerParams(
            dimension_semantics=("parallel",),
            vmem_limit_bytes=vmem_limit),
        cost_estimate=cost,
    )(p2, w2)


def _finalize_call(y2, ys, aff, tm, act, vmem_limit):
    mp, cp = y2.shape
    kern = functools.partial(finalize_kernel, act=act)
    cost = pl.CostEstimate(flops=8 * mp * cp, transcendentals=0,
                           bytes_accessed=2 * mp * cp * 2 + mp * cp * 4)
    return pl.pallas_call(
        kern,
        out_shape=jax.ShapeDtypeStruct((mp, cp), jnp.float32),
        grid=(mp // tm,),
        in_specs=[pl.BlockSpec((tm, cp), lambda i: (i, 0)),
                  pl.BlockSpec((tm, cp), lambda i: (i, 0)),
                  pl.BlockSpec((4, cp), lambda i: (0, 0))],
        out_specs=pl.BlockSpec((tm, cp), lambda i: (i, 0)),
        compiler_params=pltpu.CompilerParams(
            dimension_semantics=("parallel",),     # pure elementwise
            vmem_limit_bytes=vmem_limit),
        cost_estimate=cost,
    )(y2, ys, aff)


# ---------------------------------------------------------------------------
# Host-side glue: bf16 im2col, weight packing, stat -> affine folding
# ---------------------------------------------------------------------------
def _im2col(x, stride, kp, mp):
    """x: (N,H,W,C) -> bf16 (mp, kp) patches for a 3x3 conv, padding=1."""
    N, H, W, C = x.shape
    Ho = (H + 2 - 3) // stride + 1
    Wo = (W + 2 - 3) // stride + 1
    xp = jnp.pad(x.astype(jnp.bfloat16), ((0, 0), (1, 1), (1, 1), (0, 0)))
    cols = []
    for ky in range(3):
        for kx in range(3):
            cols.append(xp[:, ky:ky + stride * (Ho - 1) + 1:stride,
                           kx:kx + stride * (Wo - 1) + 1:stride, :])
    p = jnp.concatenate(cols, axis=-1).reshape(N * Ho * Wo, 9 * C)
    return jnp.pad(p, ((0, mp - N * Ho * Wo), (0, kp - 9 * C)))


def _reshape_w(w, kp, cp):
    """(Cout,Cin,3,3) -> bf16 (kp, cp) matmul weight matching im2col order."""
    cout = w.shape[0]
    wm = jnp.transpose(w, (2, 3, 1, 0)).reshape(-1, cout)
    wm = jnp.pad(wm, ((0, kp - wm.shape[0]), (0, cp - cout)))
    return wm.astype(jnp.bfloat16)


def _bn_affine(stat_sum, stat_sumsq, g, beta, count):
    """Fold batch-stat BatchNorm into per-channel scale/shift."""
    mean = stat_sum / count
    var = jnp.maximum(stat_sumsq / count - mean * mean, 0.0)  # biased var
    scale = g * lax.rsqrt(var + EPS)
    shift = beta - mean * scale
    return scale, shift


def res_block_down_pallas(x_nchw, params, act=True):
    x = jnp.transpose(x_nchw, (0, 2, 3, 1)).astype(jnp.float32)  # NCHW -> NHWC
    N, H, W, cin = x.shape
    cout = params["w2"].shape[0]
    c1 = cin                                   # conv1: Cin -> Cin
    Ho = (H + 2 - 3) // 2 + 1
    Wo = (W + 2 - 3) // 2 + 1
    M = N * Ho * Wo

    # Lane-dense padded sizes and chip-aware tiles / VMEM limit.
    c1p = _round_up(c1, LANE)
    cp = _round_up(cout, LANE)
    k1p = _round_up(9 * cin, LANE)             # conv1 / shortcut contraction
    k2p = _round_up(9 * c1, LANE)              # conv2 contraction
    vmem_limit, tm_cap = _chip_budget()
    tm = min(tm_cap, _round_up(M, 8))
    mp = _round_up(M, tm)
    tm_fin = _largest_tile(mp, tm, 2048)       # bigger tile for elementwise pass

    # Stride-2 bf16 patches of x: built once, read once (conv1 + shortcut
    # matmuls both live in pass 1).  Conv biases omitted everywhere: exactly
    # cancelled by batch-statistics BN.
    p1 = _im2col(x, 2, k1p, mp)

    # ---- pass 1: conv1 + shortcut matmuls + their BN batch statistics ----
    w1 = _reshape_w(params["w1"], k1p, c1p)
    ws = _reshape_w(params["ws"], k1p, cp)
    y1, ys, s1, ss = _pass1_call(p1, w1, ws, tm, vmem_limit)
    s1 = jnp.sum(s1, axis=0)                   # per-tile partials -> totals
    ss = jnp.sum(ss, axis=0)

    g1 = jnp.pad(params["g1"], (0, c1p - c1))
    b1 = jnp.pad(params["beta1"], (0, c1p - c1))
    sc1, sh1 = _bn_affine(s1[0], s1[1], g1, b1, float(M))

    # BN1 apply + LeakyReLU: cheap per-element affine fused by XLA into the
    # stride-1 im2col gather below (padded rows/channels of y1 are unused).
    # TODO(synk): in-kernel halo-tile 9-tap conv2 accumulation instead of im2col.
    h = _lrelu(y1[:M, :c1].astype(jnp.float32) * sc1[:c1] + sh1[:c1])
    p2 = _im2col(h.reshape(N, Ho, Wo, c1), 1, k2p, mp)

    # ---- pass 2: conv2 matmul + its BN batch statistics -------------------
    w2 = _reshape_w(params["w2"], k2p, cp)
    y2, s2 = _pass2_call(p2, w2, tm, vmem_limit)
    s2 = jnp.sum(s2, axis=0)

    g2 = jnp.pad(params["g2"], (0, cp - cout))
    b2 = jnp.pad(params["beta2"], (0, cp - cout))
    gs = jnp.pad(params["gs"], (0, cp - cout))
    bs = jnp.pad(params["betas"], (0, cp - cout))
    sc2, sh2 = _bn_affine(s2[0], s2[1], g2, b2, float(M))
    scs, shs = _bn_affine(ss[0], ss[1], gs, bs, float(M))
    aff = jnp.stack([sc2, sh2, scs, shs], axis=0)          # (4, cp) f32

    # ---- pass 3: normalize both branches (+LeakyReLU) + residual add ------
    out = _finalize_call(y2, ys, aff, tm_fin, act, vmem_limit)
    out = out[:M, :cout].reshape(N, Ho, Wo, cout)
    return jnp.transpose(out, (0, 3, 1, 2))                # NHWC -> NCHW


res_block_down_pallas = jax.jit(res_block_down_pallas, static_argnames=("act",))


# ---------------------------------------------------------------------------
# Pure-JAX f32 reference (PyTorch semantics incl. conv bias) for correctness
# ---------------------------------------------------------------------------
def _conv_ref(x, w, b, stride):
    w_hwio = jnp.transpose(w, (2, 3, 1, 0))
    y = lax.conv_general_dilated(x, w_hwio, window_strides=(stride, stride),
                                 padding=((1, 1), (1, 1)),
                                 dimension_numbers=("NHWC", "HWIO", "NHWC"),
                                 precision=lax.Precision.HIGHEST)
    return y + b


def _bn_ref(y, g, b):
    m = jnp.mean(y, axis=(0, 1, 2), keepdims=True)
    v = jnp.mean((y - m) ** 2, axis=(0, 1, 2), keepdims=True)
    return (y - m) * g * lax.rsqrt(v + EPS) + b


def res_block_down_ref(x_nchw, params, act=True):
    x = jnp.transpose(x_nchw, (0, 2, 3, 1))
    h = _lrelu(_bn_ref(_conv_ref(x, params["w1"], params["b1"], 2),
                       params["g1"], params["beta1"]))
    out = _bn_ref(_conv_ref(h, params["w2"], params["b2"], 1),
                  params["g2"], params["beta2"])
    sc = _bn_ref(_conv_ref(x, params["ws"], params["bs"], 2),
                 params["gs"], params["betas"])
    if act:
        out = _lrelu(out)
        sc = _lrelu(sc)
    return jnp.transpose(out + sc, (0, 3, 1, 2))


# ---------------------------------------------------------------------------
def make_params(key, cin, cout):
    ks = jax.random.split(key, 12)
    def w(k, co, ci):
        return 0.1 * jax.random.normal(k, (co, ci, 3, 3), jnp.float32)
    def v(k, c):
        return 0.1 * jax.random.normal(k, (c,), jnp.float32)
    return dict(
        w1=w(ks[0], cin, cin), b1=v(ks[1], cin),
        g1=1.0 + v(ks[2], cin), beta1=v(ks[3], cin),
        w2=w(ks[4], cout, cin), b2=v(ks[5], cout),
        g2=1.0 + v(ks[6], cout), beta2=v(ks[7], cout),
        ws=w(ks[8], cout, cin), bs=v(ks[9], cout),
        gs=1.0 + v(ks[10], cout), betas=v(ks[11], cout),
    )


if __name__ == "__main__":
    key = jax.random.PRNGKey(0)
    kx, kp = jax.random.split(key)

    N, Cin, H, W = 2, 4, 16, 16
    Cout = 8
    x = jax.random.normal(kx, (N, Cin, H, W), jnp.float32)
    params = make_params(kp, Cin, Cout)

    out = res_block_down_pallas(x, params, act=True)
    out = jax.block_until_ready(out)
    assert out.shape == (N, Cout, H // 2, W // 2), out.shape

    ref = jax.block_until_ready(res_block_down_ref(x, params, act=True))
    # bf16 MXU operands + bf16 intermediate storage (vs. the f32 HIGHEST
    # reference) through two BN re-normalizations: use a mixed abs/rel check.
    err = float(jnp.max(jnp.abs(out - ref) / (1.0 + jnp.abs(ref))))
    assert err < 3e-2, f"mismatch vs reference: {err}"

    print("KERNEL_OK")
</pallas_src>

<mosaic_0001>
module attributes {stable_mosaic.version = 11 : i64} {
  func.func @conv1_shortcut_kernel(%arg0: i32, %arg1: memref<128x128xbf16, #tpu.memory_space<vmem>>, %arg2: memref<128x128xbf16, #tpu.memory_space<vmem>>, %arg3: memref<128x128xbf16, #tpu.memory_space<vmem>>, %arg4: memref<128x128xbf16, #tpu.memory_space<vmem>>, %arg5: memref<128x128xbf16, #tpu.memory_space<vmem>>, %arg6: memref<1x2x128xf32, #tpu.memory_space<vmem>>, %arg7: memref<1x2x128xf32, #tpu.memory_space<vmem>>) attributes {dimension_semantics = [#tpu.dimension_semantics<parallel>], iteration_bounds = array<i64: 1>, scalar_prefetch = 0 : i64, scratch_operands = 0 : i64, tpu.core_type = #tpu.core_type<tc>, window_params = [{transform_indices = @transform_0, window_bounds = array<i64: 128, 128>}, {pipeline_mode = #tpu.pipeline_mode<synchronous>, transform_indices = @transform_1, window_bounds = array<i64: 128, 128>}, {pipeline_mode = #tpu.pipeline_mode<synchronous>, transform_indices = @transform_2, window_bounds = array<i64: 128, 128>}, {transform_indices = @transform_3, window_bounds = array<i64: 128, 128>}, {transform_indices = @transform_4, window_bounds = array<i64: 128, 128>}, {transform_indices = @transform_5, window_bounds = array<i64: 1, 2, 128>}, {transform_indices = @transform_6, window_bounds = array<i64: 1, 2, 128>}]} {
    %c0 = arith.constant 0 : index
    %c0_0 = arith.constant 0 : index
    %0 = vector.load %arg1[%c0, %c0_0] : memref<128x128xbf16, #tpu.memory_space<vmem>>, vector<128x128xbf16>
    %c0_1 = arith.constant 0 : index
    %c0_2 = arith.constant 0 : index
    %1 = vector.load %arg2[%c0_1, %c0_2] : memref<128x128xbf16, #tpu.memory_space<vmem>>, vector<128x128xbf16>
    %cst = arith.constant dense<0.000000e+00> : vector<128x128xf32>
    %2 = tpu.matmul %0, %1, %cst {dimension_numbers = #tpu.dot_dimension_numbers<[1], [0], [0], [1], [0, 0, 1, 1], [], []>} : vector<128x128xbf16>, vector<128x128xbf16>, vector<128x128xf32> -> vector<128x128xf32>
    %3 = arith.truncf %2 : vector<128x128xf32> to vector<128x128xbf16>
    %c0_3 = arith.constant 0 : index
    %c0_4 = arith.constant 0 : index
    %4 = vector.load %arg4[%c0_3, %c0_4] : memref<128x128xbf16, #tpu.memory_space<vmem>>, vector<128x128xbf16>
    tpu.vector_store %arg4[%c0_3, %c0_4], %3 {strides = array<i32>} : memref<128x128xbf16, #tpu.memory_space<vmem>>, vector<128x128xbf16>,
    %cst_5 = arith.constant dense<0.000000e+00> : vector<128xf32>
    %5 = vector.multi_reduction <add>, %2, %cst_5 [0] : vector<128x128xf32> to vector<128xf32>
    %6 = vector.shape_cast %5 : vector<128xf32> to vector<1x128xf32>
    %7 = arith.mulf %2, %2 : vector<128x128xf32>
    %cst_6 = arith.constant dense<0.000000e+00> : vector<128xf32>
    %8 = vector.multi_reduction <add>, %7, %cst_6 [0] : vector<128x128xf32> to vector<128xf32>
    %9 = vector.shape_cast %8 : vector<128xf32> to vector<1x128xf32>
    %10 = tpu.concatenate %6, %9 in 0 : vector<1x128xf32>, vector<1x128xf32> -> vector<2x128xf32>
    %11 = vector.shape_cast %10 : vector<2x128xf32> to vector<1x2x128xf32>
    %c0_7 = arith.constant 0 : index
    %c0_8 = arith.constant 0 : index
    %c0_9 = arith.constant 0 : index
    %12 = vector.load %arg6[%c0_7, %c0_8, %c0_9] : memref<1x2x128xf32, #tpu.memory_space<vmem>>, vector<1x2x128xf32>
    tpu.vector_store %arg6[%c0_7, %c0_8, %c0_9], %11 {strides = array<i32>} : memref<1x2x128xf32, #tpu.memory_space<vmem>>, vector<1x2x128xf32>,
    %c0_10 = arith.constant 0 : index
    %c0_11 = arith.constant 0 : index
    %13 = vector.load %arg3[%c0_10, %c0_11] : memref<128x128xbf16, #tpu.memory_space<vmem>>, vector<128x128xbf16>
    %cst_12 = arith.constant dense<0.000000e+00> : vector<128x128xf32>
    %14 = tpu.matmul %0, %13, %cst_12 {dimension_numbers = #tpu.dot_dimension_numbers<[1], [0], [0], [1], [0, 0, 1, 1], [], []>} : vector<128x128xbf16>, vector<128x128xbf16>, vector<128x128xf32> -> vector<128x128xf32>
    %15 = arith.truncf %14 : vector<128x128xf32> to vector<128x128xbf16>
    %c0_13 = arith.constant 0 : index
    %c0_14 = arith.constant 0 : index
    %16 = vector.load %arg5[%c0_13, %c0_14] : memref<128x128xbf16, #tpu.memory_space<vmem>>, vector<128x128xbf16>
    tpu.vector_store %arg5[%c0_13, %c0_14], %15 {strides = array<i32>} : memref<128x128xbf16, #tpu.memory_space<vmem>>, vector<128x128xbf16>,
    %cst_15 = arith.constant dense<0.000000e+00> : vector<128xf32>
    %17 = vector.multi_reduction <add>, %14, %cst_15 [0] : vector<128x128xf32> to vector<128xf32>
    %18 = vector.shape_cast %17 : vector<128xf32> to vector<1x128xf32>
    %19 = arith.mulf %14, %14 : vector<128x128xf32>
    %cst_16 = arith.constant dense<0.000000e+00> : vector<128xf32>
    %20 = vector.multi_reduction <add>, %19, %cst_16 [0] : vector<128x128xf32> to vector<128xf32>
    %21 = vector.shape_cast %20 : vector<128xf32> to vector<1x128xf32>
    %22 = tpu.concatenate %18, %21 in 0 : vector<1x128xf32>, vector<1x128xf32> -> vector<2x128xf32>
    %23 = vector.shape_cast %22 : vector<2x128xf32> to vector<1x2x128xf32>
    %c0_17 = arith.constant 0 : index
    %c0_18 = arith.constant 0 : index
    %c0_19 = arith.constant 0 : index
    %24 = vector.load %arg7[%c0_17, %c0_18, %c0_19] : memref<1x2x128xf32, #tpu.memory_space<vmem>>, vector<1x2x128xf32>
    tpu.vector_store %arg7[%c0_17, %c0_18, %c0_19], %23 {strides = array<i32>} : memref<1x2x128xf32, #tpu.memory_space<vmem>>, vector<1x2x128xf32>,
    return
  }
  func.func @transform_0(%arg0: i32) -> (i32, i32) {
    %c0_i32 = arith.constant 0 : i32
    %c0_i32_0 = arith.constant 0 : i32
    return %arg0, %c0_i32 : i32, i32
  }
  func.func @transform_1(%arg0: i32) -> (i32, i32) {
    %c0_i32 = arith.constant 0 : i32
    %c0_i32_0 = arith.constant 0 : i32
    %c0_i32_1 = arith.constant 0 : i32
    return %c0_i32, %c0_i32_0 : i32, i32
  }
  func.func @transform_2(%arg0: i32) -> (i32, i32) {
    %c0_i32 = arith.constant 0 : i32
    %c0_i32_0 = arith.constant 0 : i32
    %c0_i32_1 = arith.constant 0 : i32
    return %c0_i32, %c0_i32_0 : i32, i32
  }
  func.func @transform_3(%arg0: i32) -> (i32, i32) {
    %c0_i32 = arith.constant 0 : i32
    %c0_i32_0 = arith.constant 0 : i32
    return %arg0, %c0_i32 : i32, i32
  }
  func.func @transform_4(%arg0: i32) -> (i32, i32) {
    %c0_i32 = arith.constant 0 : i32
    %c0_i32_0 = arith.constant 0 : i32
    return %arg0, %c0_i32 : i32, i32
  }
  func.func @transform_5(%arg0: i32) -> (i32, i32, i32) {
    %c0_i32 = arith.constant 0 : i32
    %c0_i32_0 = arith.constant 0 : i32
    %c0_i32_1 = arith.constant 0 : i32
    return %arg0, %c0_i32, %c0_i32_0 : i32, i32, i32
  }
  func.func @transform_6(%arg0: i32) -> (i32, i32, i32) {
    %c0_i32 = arith.constant 0 : i32
    %c0_i32_0 = arith.constant 0 : i32
    %c0_i32_1 = arith.constant 0 : i32
    return %arg0, %c0_i32, %c0_i32_0 : i32, i32, i32
  }
}

module attributes {stable_mosaic.version = 11 : i64} {
  func.func @conv2_stats_kernel(%arg0: i32, %arg1: memref<128x128xbf16, #tpu.memory_space<vmem>>, %arg2: memref<128x128xbf16, #tpu.memory_space<vmem>>, %arg3: memref<128x128xbf16, #tpu.memory_space<vmem>>, %arg4: memref<1x2x128xf32, #tpu.memory_space<vmem>>) attributes {dimension_semantics = [#tpu.dimension_semantics<parallel>], iteration_bounds = array<i64: 1>, scalar_prefetch = 0 : i64, scratch_operands = 0 : i64, tpu.core_type = #tpu.core_type<tc>, window_params = [{transform_indices = @transform_0, window_bounds = array<i64: 128, 128>}, {pipeline_mode = #tpu.pipeline_mode<synchronous>, transform_indices = @transform_1, window_bounds = array<i64: 128, 128>}, {transform_indices = @transform_2, window_bounds = array<i64: 128, 128>}, {transform_indices = @transform_3, window_bounds = array<i64: 1, 2, 128>}]} {
    %c0 = arith.constant 0 : index
    %c0_0 = arith.constant 0 : index
    %0 = vector.load %arg1[%c0, %c0_0] : memref<128x128xbf16, #tpu.memory_space<vmem>>, vector<128x128xbf16>
    %c0_1 = arith.constant 0 : index
    %c0_2 = arith.constant 0 : index
    %1 = vector.load %arg2[%c0_1, %c0_2] : memref<128x128xbf16, #tpu.memory_space<vmem>>, vector<128x128xbf16>
    %cst = arith.constant dense<0.000000e+00> : vector<128x128xf32>
    %2 = tpu.matmul %0, %1, %cst {dimension_numbers = #tpu.dot_dimension_numbers<[1], [0], [0], [1], [0, 0, 1, 1], [], []>} : vector<128x128xbf16>, vector<128x128xbf16>, vector<128x128xf32> -> vector<128x128xf32>
    %3 = arith.truncf %2 : vector<128x128xf32> to vector<128x128xbf16>
    %c0_3 = arith.constant 0 : index
    %c0_4 = arith.constant 0 : index
    %4 = vector.load %arg3[%c0_3, %c0_4] : memref<128x128xbf16, #tpu.memory_space<vmem>>, vector<128x128xbf16>
    tpu.vector_store %arg3[%c0_3, %c0_4], %3 {strides = array<i32>} : memref<128x128xbf16, #tpu.memory_space<vmem>>, vector<128x128xbf16>,
    %cst_5 = arith.constant dense<0.000000e+00> : vector<128xf32>
    %5 = vector.multi_reduction <add>, %2, %cst_5 [0] : vector<128x128xf32> to vector<128xf32>
    %6 = vector.shape_cast %5 : vector<128xf32> to vector<1x128xf32>
    %7 = arith.mulf %2, %2 : vector<128x128xf32>
    %cst_6 = arith.constant dense<0.000000e+00> : vector<128xf32>
    %8 = vector.multi_reduction <add>, %7, %cst_6 [0] : vector<128x128xf32> to vector<128xf32>
    %9 = vector.shape_cast %8 : vector<128xf32> to vector<1x128xf32>
    %10 = tpu.concatenate %6, %9 in 0 : vector<1x128xf32>, vector<1x128xf32> -> vector<2x128xf32>
    %11 = vector.shape_cast %10 : vector<2x128xf32> to vector<1x2x128xf32>
    %c0_7 = arith.constant 0 : index
    %c0_8 = arith.constant 0 : index
    %c0_9 = arith.constant 0 : index
    %12 = vector.load %arg4[%c0_7, %c0_8, %c0_9] : memref<1x2x128xf32, #tpu.memory_space<vmem>>, vector<1x2x128xf32>
    tpu.vector_store %arg4[%c0_7, %c0_8, %c0_9], %11 {strides = array<i32>} : memref<1x2x128xf32, #tpu.memory_space<vmem>>, vector<1x2x128xf32>,
    return
  }
  func.func @transform_0(%arg0: i32) -> (i32, i32) {
    %c0_i32 = arith.constant 0 : i32
    %c0_i32_0 = arith.constant 0 : i32
    return %arg0, %c0_i32 : i32, i32
  }
  func.func @transform_1(%arg0: i32) -> (i32, i32) {
    %c0_i32 = arith.constant 0 : i32
    %c0_i32_0 = arith.constant 0 : i32
    %c0_i32_1 = arith.constant 0 : i32
    return %c0_i32, %c0_i32_0 : i32, i32
  }
  func.func @transform_2(%arg0: i32) -> (i32, i32) {
    %c0_i32 = arith.constant 0 : i32
    %c0_i32_0 = arith.constant 0 : i32
    return %arg0, %c0_i32 : i32, i32
  }
  func.func @transform_3(%arg0: i32) -> (i32, i32, i32) {
    %c0_i32 = arith.constant 0 : i32
    %c0_i32_0 = arith.constant 0 : i32
    %c0_i32_1 = arith.constant 0 : i32
    return %arg0, %c0_i32, %c0_i32_0 : i32, i32, i32
  }
}

module attributes {stable_mosaic.version = 11 : i64} {
  func.func @finalize_kernel(%arg0: i32, %arg1: memref<128x128xbf16, #tpu.memory_space<vmem>>, %arg2: memref<128x128xbf16, #tpu.memory_space<vmem>>, %arg3: memref<4x128xf32, #tpu.memory_space<vmem>>, %arg4: memref<128x128xf32, #tpu.memory_space<vmem>>) attributes {dimension_semantics = [#tpu.dimension_semantics<parallel>], iteration_bounds = array<i64: 1>, scalar_prefetch = 0 : i64, scratch_operands = 0 : i64, tpu.core_type = #tpu.core_type<tc>, window_params = [{transform_indices = @transform_0, window_bounds = array<i64: 128, 128>}, {transform_indices = @transform_1, window_bounds = array<i64: 128, 128>}, {pipeline_mode = #tpu.pipeline_mode<synchronous>, transform_indices = @transform_2, window_bounds = array<i64: 4, 128>}, {transform_indices = @transform_3, window_bounds = array<i64: 128, 128>}]} {
    %c0 = arith.constant 0 : index
    %c0_0 = arith.constant 0 : index
    %0 = vector.load %arg1[%c0, %c0_0] : memref<128x128xbf16, #tpu.memory_space<vmem>>, vector<128x128xbf16>
    %1 = arith.extf %0 : vector<128x128xbf16> to vector<128x128xf32>
    %c0_1 = arith.constant 0 : index
    %c0_2 = arith.constant 0 : index
    %2 = vector.load %arg3[%c0_1, %c0_2] : memref<4x128xf32, #tpu.memory_space<vmem>>, vector<1x128xf32>
    %3 = vector.broadcast %2 : vector<1x128xf32> to vector<128x128xf32>
    %4 = arith.mulf %1, %3 : vector<128x128xf32>
    %c1 = arith.constant 1 : index
    %c0_3 = arith.constant 0 : index
    %5 = vector.load %arg3[%c1, %c0_3] : memref<4x128xf32, #tpu.memory_space<vmem>>, vector<1x128xf32>
    %6 = vector.broadcast %5 : vector<1x128xf32> to vector<128x128xf32>
    %7 = arith.addf %4, %6 : vector<128x128xf32>
    %c0_4 = arith.constant 0 : index
    %c0_5 = arith.constant 0 : index
    %8 = vector.load %arg2[%c0_4, %c0_5] : memref<128x128xbf16, #tpu.memory_space<vmem>>, vector<128x128xbf16>
    %9 = arith.extf %8 : vector<128x128xbf16> to vector<128x128xf32>
    %c2 = arith.constant 2 : index
    %c0_6 = arith.constant 0 : index
    %10 = vector.load %arg3[%c2, %c0_6] : memref<4x128xf32, #tpu.memory_space<vmem>>, vector<1x128xf32>
    %11 = vector.broadcast %10 : vector<1x128xf32> to vector<128x128xf32>
    %12 = arith.mulf %9, %11 : vector<128x128xf32>
    %c3 = arith.constant 3 : index
    %c0_7 = arith.constant 0 : index
    %13 = vector.load %arg3[%c3, %c0_7] : memref<4x128xf32, #tpu.memory_space<vmem>>, vector<1x128xf32>
    %14 = vector.broadcast %13 : vector<1x128xf32> to vector<128x128xf32>
    %15 = arith.addf %12, %14 : vector<128x128xf32>
    %cst = arith.constant 0.000000e+00 : f32
    %16 = vector.broadcast %cst : f32 to vector<128x128xf32>
    %17 = arith.cmpf oge, %7, %16 : vector<128x128xf32>
    %cst_8 = arith.constant 2.000000e-01 : f32
    %18 = vector.broadcast %cst_8 : f32 to vector<128x128xf32>
    %19 = arith.mulf %18, %7 : vector<128x128xf32>
    %20 = arith.select %17, %7, %19 : vector<128x128xi1>, vector<128x128xf32>
    %cst_9 = arith.constant 0.000000e+00 : f32
    %21 = vector.broadcast %cst_9 : f32 to vector<128x128xf32>
    %22 = arith.cmpf oge, %15, %21 : vector<128x128xf32>
    %cst_10 = arith.constant 2.000000e-01 : f32
    %23 = vector.broadcast %cst_10 : f32 to vector<128x128xf32>
    %24 = arith.mulf %23, %15 : vector<128x128xf32>
    %25 = arith.select %22, %15, %24 : vector<128x128xi1>, vector<128x128xf32>
    %26 = arith.addf %20, %25 : vector<128x128xf32>
    %c0_11 = arith.constant 0 : index
    %c0_12 = arith.constant 0 : index
    %27 = vector.load %arg4[%c0_11, %c0_12] : memref<128x128xf32, #tpu.memory_space<vmem>>, vector<128x128xf32>
    tpu.vector_store %arg4[%c0_11, %c0_12], %26 {strides = array<i32>} : memref<128x128xf32, #tpu.memory_space<vmem>>, vector<128x128xf32>,
    return
  }
  func.func @transform_0(%arg0: i32) -> (i32, i32) {
    %c0_i32 = arith.constant 0 : i32
    %c0_i32_0 = arith.constant 0 : i32
    return %arg0, %c0_i32 : i32, i32
  }
  func.func @transform_1(%arg0: i32) -> (i32, i32) {
    %c0_i32 = arith.constant 0 : i32
    %c0_i32_0 = arith.constant 0 : i32
    return %arg0, %c0_i32 : i32, i32
  }
  func.func @transform_2(%arg0: i32) -> (i32, i32) {
    %c0_i32 = arith.constant 0 : i32
    %c0_i32_0 = arith.constant 0 : i32
    %c0_i32_1 = arith.constant 0 : i32
    return %c0_i32, %c0_i32_0 : i32, i32
  }
  func.func @transform_3(%arg0: i32) -> (i32, i32) {
    %c0_i32 = arith.constant 0 : i32
    %c0_i32_0 = arith.constant 0 : i32
    return %arg0, %c0_i32 : i32, i32
  }
}

</mosaic_0001>

<llo_original>
// kernel: res_block_down_pallas.4
$region0: #{res_block_down_pallas.4}
  #allocation0 [shape = 'u32[]', space=smem, size = 0x4, offset = 0x4, fixed_abs, tag = 'smem constant byte address 0x4 - core index']
  #allocation1 [shape = 'u32[72,128]{1,0:T(1,128)}', space=vmem, size = 0x9000, scoped, tag = 'internal scratch']
  %s0 = inlined_call_operand.vmem [shape: bf16[128,128], index: 0, kind: input, shape index: {}]
  %s1 = inlined_call_operand.vmem [shape: bf16[128,128], index: 1, kind: input, shape index: {}]
  %s2 = inlined_call_operand.vmem [shape: bf16[128,128], index: 2, kind: output, shape index: {0}]
  %s3 = inlined_call_operand.vmem [shape: f32[1,2,128], index: 3, kind: output, shape index: {1}]
  %4 = xla_tuple %s2, %s3
  %s5 = sld [smem:[#allocation0]]
  $region26: #{res_block_down_pallas.4} parent=0
    _
  %s7 = ssub.s32 1, %s5
  %s8 = scalar_select 0, %s7, %s5
  // Predicated region
  $region2: #{res_block_down_pallas.4} parent=0 // pred_check
    _
  $region3: #{res_block_down_pallas.4} parent=0 // pred_check_branch
    %10 = sbr.rel (0) target = $region5
  $region4: #{res_block_down_pallas.4} parent=0 // pred_region
    _
  $region5: #{res_block_down_pallas.4} parent=0 // pred_fallthru
    _
  // Predicated region
  $region6: #{res_block_down_pallas.4} parent=0 // pred_check
    _
  $region7: #{res_block_down_pallas.4} parent=0 // pred_check_branch
    %12 = sbr.rel (0) target = $region9
  $region8: #{res_block_down_pallas.4} parent=0 // pred_region
    _
  $region9: #{res_block_down_pallas.4} parent=0 // pred_fallthru
    _
  %v13 = vld [vmem:[%s0] sm:$0xf]
  %v14 = vld [vmem:[%s0 + $0x4] sm:$0xf]
  %v15 = vld [vmem:[%s0 + $0x8] sm:$0xf]
  %v16 = vld [vmem:[%s0 + $0xc] sm:$0xf]
  %v17 = vld [vmem:[%s0 + $0x10] sm:$0xf]
  %v18 = vld [vmem:[%s0 + $0x14] sm:$0xf]
  %v19 = vld [vmem:[%s0 + $0x18] sm:$0xf]
  %v20 = vld [vmem:[%s0 + $0x1c] sm:$0xf]
  %v21 = vld [vmem:[%s0 + $0x20] sm:$0xf]
  %v22 = vld [vmem:[%s0 + $0x24] sm:$0xf]
  %v23 = vld [vmem:[%s0 + $0x28] sm:$0xf]
  %v24 = vld [vmem:[%s0 + $0x2c] sm:$0xf]
  %v25 = vld [vmem:[%s0 + $0x30] sm:$0xf]
  %v26 = vld [vmem:[%s0 + $0x34] sm:$0xf]
  %v27 = vld [vmem:[%s0 + $0x38] sm:$0xf]
  %v28 = vld [vmem:[%s0 + $0x3c] sm:$0xf]
  %v29 = vld [vmem:[%s1] sm:$0xf]
  %v30 = vld [vmem:[%s1 + $0x4] sm:$0xf]
  %v31 = vld [vmem:[%s1 + $0x8] sm:$0xf]
  %v32 = vld [vmem:[%s1 + $0xc] sm:$0xf]
  %v33 = vld [vmem:[%s1 + $0x10] sm:$0xf]
  %v34 = vld [vmem:[%s1 + $0x14] sm:$0xf]
  %v35 = vld [vmem:[%s1 + $0x18] sm:$0xf]
  %v36 = vld [vmem:[%s1 + $0x1c] sm:$0xf]
  %v37 = vld [vmem:[%s1 + $0x20] sm:$0xf]
  %v38 = vld [vmem:[%s1 + $0x24] sm:$0xf]
  %v39 = vld [vmem:[%s1 + $0x28] sm:$0xf]
  %v40 = vld [vmem:[%s1 + $0x2c] sm:$0xf]
  %v41 = vld [vmem:[%s1 + $0x30] sm:$0xf]
  %v42 = vld [vmem:[%s1 + $0x34] sm:$0xf]
  %v43 = vld [vmem:[%s1 + $0x38] sm:$0xf]
  %v44 = vld [vmem:[%s1 + $0x3c] sm:$0xf]
  %v61 = vunpack.c.l.b16 %v13
  %v62 = vunpack.c.l.b16 %v14
  %v63 = vunpack.c.l.b16 %v15
  %v64 = vunpack.c.l.b16 %v16
  %v65 = vunpack.c.l.b16 %v17
  %v66 = vunpack.c.l.b16 %v18
  %v67 = vunpack.c.l.b16 %v19
  %v68 = vunpack.c.l.b16 %v20
  %v69 = vunpack.c.l.b16 %v21
  %v70 = vunpack.c.l.b16 %v22
  %v71 = vunpack.c.l.b16 %v23
  %v72 = vunpack.c.l.b16 %v24
  %v73 = vunpack.c.l.b16 %v25
  %v74 = vunpack.c.l.b16 %v26
  %v75 = vunpack.c.l.b16 %v27
  %v76 = vunpack.c.l.b16 %v28
  %v77 = vpack.c.b16 %v62, %v61
  %v78 = vpack.c.b16 %v64, %v63
  %v79 = vpack.c.b16 %v66, %v65
  %v80 = vpack.c.b16 %v68, %v67
  %v81 = vpack.c.b16 %v70, %v69
  %v82 = vpack.c.b16 %v72, %v71
  %v83 = vpack.c.b16 %v74, %v73
  %v84 = vpack.c.b16 %v76, %v75
  %v109 = vunpack.c.l.b16 %v29
  %v110 = vunpack.c.l.b16 %v30
  %v111 = vunpack.c.l.b16 %v31
  %v112 = vunpack.c.l.b16 %v32
  %v113 = vunpack.c.l.b16 %v33
  %v114 = vunpack.c.l.b16 %v34
  %v115 = vunpack.c.l.b16 %v35
  %v116 = vunpack.c.l.b16 %v36
  %v117 = vunpack.c.l.b16 %v37
  %v118 = vunpack.c.l.b16 %v38
  %v119 = vunpack.c.l.b16 %v39
  %v120 = vunpack.c.l.b16 %v40
  %v121 = vunpack.c.l.b16 %v41
  %v122 = vunpack.c.l.b16 %v42
  %v123 = vunpack.c.l.b16 %v43
  %v124 = vunpack.c.l.b16 %v44
  %v125 = vpack.c.b16 %v110, %v109
  %v126 = vpack.c.b16 %v112, %v111
  %v127 = vpack.c.b16 %v114, %v113
  %v128 = vpack.c.b16 %v116, %v115
  %v129 = vpack.c.b16 %v118, %v117
  %v130 = vpack.c.b16 %v120, %v119
  %v131 = vpack.c.b16 %v122, %v121
  %v132 = vpack.c.b16 %v124, %v123
  %141 = vmatpush.bf16.msra.mxu0 %v132
  %142 = vmatpush.bf16.msra.mxu0 %v131
  %143 = vmatpush.bf16.msra.mxu0 %v130
  %144 = vmatpush.bf16.msra.mxu0 %v129
  %145 = vmatpush.bf16.msra.mxu0 %v128
  %146 = vmatpush.bf16.msra.mxu0 %v127
  %147 = vmatpush.bf16.msra.mxu0 %v126
  %148 = vmatpush.bf16.msra.mxu0 %v125
  %149 = vmatmul.bf16.gmra.mxu0 %v77
  %v150 = vpop.f32.mrf.mxu0
  %v151 = vadd.f32 0.0, %v150
  %v152 = vpop.f32.mrf.mxu0
  %v153 = vadd.f32 0.0, %v152
  %154 = vmatmul.bf16.gmra.mxu0 %v78
  %v155 = vpop.f32.mrf.mxu0
  %v156 = vadd.f32 0.0, %v155
  %v157 = vpop.f32.mrf.mxu0
  %v158 = vadd.f32 0.0, %v157
  %159 = vmatmul.bf16.gmra.mxu0 %v79
  %v160 = vpop.f32.mrf.mxu0
  %v161 = vadd.f32 0.0, %v160
  %v162 = vpop.f32.mrf.mxu0
  %v163 = vadd.f32 0.0, %v162
  %164 = vmatmul.bf16.gmra.mxu0 %v80
  %v165 = vpop.f32.mrf.mxu0
  %v166 = vadd.f32 0.0, %v165
  %v167 = vpop.f32.mrf.mxu0
  %v168 = vadd.f32 0.0, %v167
  %169 = vmatmul.bf16.gmra.mxu0 %v81
  %v170 = vpop.f32.mrf.mxu0
  %v171 = vadd.f32 0.0, %v170
  %v172 = vpop.f32.mrf.mxu0
  %v173 = vadd.f32 0.0, %v172
  %174 = vmatmul.bf16.gmra.mxu0 %v82
  %v175 = vpop.f32.mrf.mxu0
  %v176 = vadd.f32 0.0, %v175
  %v177 = vpop.f32.mrf.mxu0
  %v178 = vadd.f32 0.0, %v177
  %179 = vmatmul.bf16.gmra.mxu0 %v83
  %v180 = vpop.f32.mrf.mxu0
  %v181 = vadd.f32 0.0, %v180
  %v182 = vpop.f32.mrf.mxu0
  %v183 = vadd.f32 0.0, %v182
  %184 = vmatmul.bf16.gmra.mxu0 %v84
  %v185 = vpop.f32.mrf.mxu0
  %v186 = vadd.f32 0.0, %v185
  %v187 = vpop.f32.mrf.mxu0
  %v188 = vadd.f32 0.0, %v187
  %189 = vdwg.mxu0
  %v190 = vpack.c.bf16 %v151, %v151
  %v191 = vpack.c.bf16 %v153, %v153
  %v192 = vpack.c.bf16 %v156, %v156
  %v193 = vpack.c.bf16 %v158, %v158
  %v194 = vpack.c.bf16 %v161, %v161
  %v195 = vpack.c.bf16 %v163, %v163
  %v196 = vpack.c.bf16 %v166, %v166
  %v197 = vpack.c.bf16 %v168, %v168
  %v198 = vpack.c.bf16 %v171, %v171
  %v199 = vpack.c.bf16 %v173, %v173
  %v200 = vpack.c.bf16 %v176, %v176
  %v201 = vpack.c.bf16 %v178, %v178
  %v202 = vpack.c.bf16 %v181, %v181
  %v203 = vpack.c.bf16 %v183, %v183
  %v204 = vpack.c.bf16 %v186, %v186
  %v205 = vpack.c.bf16 %v188, %v188
  %206 = vst [vmem:[%s2] sm:$0xf] %v190
  %207 = vst [vmem:[%s2 + $0x4] sm:$0xf] %v191
  %208 = vst [vmem:[%s2 + $0x8] sm:$0xf] %v192
  %209 = vst [vmem:[%s2 + $0xc] sm:$0xf] %v193
  %210 = vst [vmem:[%s2 + $0x10] sm:$0xf] %v194
  %211 = vst [vmem:[%s2 + $0x14] sm:$0xf] %v195
  %212 = vst [vmem:[%s2 + $0x18] sm:$0xf] %v196
  %213 = vst [vmem:[%s2 + $0x1c] sm:$0xf] %v197
  %214 = vst [vmem:[%s2 + $0x20] sm:$0xf] %v198
  %215 = vst [vmem:[%s2 + $0x24] sm:$0xf] %v199
  %216 = vst [vmem:[%s2 + $0x28] sm:$0xf] %v200
  %217 = vst [vmem:[%s2 + $0x2c] sm:$0xf] %v201
  %218 = vst [vmem:[%s2 + $0x30] sm:$0xf] %v202
  %219 = vst [vmem:[%s2 + $0x34] sm:$0xf] %v203
  %220 = vst [vmem:[%s2 + $0x38] sm:$0xf] %v204
  %221 = vst [vmem:[%s2 + $0x3c] sm:$0xf] %v205
  %v222 = vadd.f32 %v151, %v153
  %v223 = vadd.f32 %v222, %v156
  %v224 = vadd.f32 %v223, %v158
  %v225 = vadd.f32 %v224, %v161
  %v226 = vadd.f32 %v225, %v163
  %v227 = vadd.f32 %v226, %v166
  %v228 = vadd.f32 %v227, %v168
  %v229 = vadd.f32 %v228, %v171
  %v230 = vadd.f32 %v229, %v173
  %v231 = vadd.f32 %v230, %v176
  %v232 = vadd.f32 %v231, %v178
  %v233 = vadd.f32 %v232, %v181
  %v234 = vadd.f32 %v233, %v183
  %v235 = vadd.f32 %v234, %v186
  %v236 = vadd.f32 %v235, %v188
  %v237 = vrot.slane %v236, 4
  %v238 = vadd.f32 %v236, %v237
  %v239 = vrot.slane %v238, 2
  %v240 = vadd.f32 %v238, %v239
  %v241 = vrot.slane %v240, 1
  %v242 = vadd.f32 %v240, %v241
  %v243 = vmul.f32 %v151, %v151
  %v244 = vmul.f32 %v153, %v153
  %v245 = vmul.f32 %v156, %v156
  %v246 = vmul.f32 %v158, %v158
  %v247 = vmul.f32 %v161, %v161
  %v248 = vmul.f32 %v163, %v163
  %v249 = vmul.f32 %v166, %v166
  %v250 = vmul.f32 %v168, %v168
  %v251 = vmul.f32 %v171, %v171
  %v252 = vmul.f32 %v173, %v173
  %v253 = vmul.f32 %v176, %v176
  %v254 = vmul.f32 %v178, %v178
  %v255 = vmul.f32 %v181, %v181
  %v256 = vmul.f32 %v183, %v183
  %v257 = vmul.f32 %v186, %v186
  %v258 = vmul.f32 %v188, %v188
  %v259 = vadd.f32 %v243, %v244
  %v260 = vadd.f32 %v259, %v245
  %v261 = vadd.f32 %v260, %v246
  %v262 = vadd.f32 %v261, %v247
  %v263 = vadd.f32 %v262, %v248
  %v264 = vadd.f32 %v263, %v249
  %v265 = vadd.f32 %v264, %v250
  %v266 = vadd.f32 %v265, %v251
  %v267 = vadd.f32 %v266, %v252
  %v268 = vadd.f32 %v267, %v253
  %v269 = vadd.f32 %v268, %v254
  %v270 = vadd.f32 %v269, %v255
  %v271 = vadd.f32 %v270, %v256
  %v272 = vadd.f32 %v271, %v257
  %v273 = vadd.f32 %v272, %v258
  %v274 = vrot.slane %v273, 4
  %v275 = vadd.f32 %v273, %v274
  %v276 = vrot.slane %v275, 2
  %v277 = vadd.f32 %v275, %v276
  %v278 = vrot.slane %v277, 1
  %v279 = vadd.f32 %v277, %v278
  %vm280 = vcmask 1040384
  %v281 = vsel %vm280, %v242, %v279
  %282 = vst [vmem:[%s3] sm:$0x3] %v281
  // Predicated region
  $region10: #{res_block_down_pallas.4} parent=0 // pred_check
    _
  $region11: #{res_block_down_pallas.4} parent=0 // pred_check_branch
    %284 = sbr.rel (0) target = $region13
  $region12: #{res_block_down_pallas.4} parent=0 // pred_region
    _
  $region13: #{res_block_down_pallas.4} parent=0 // pred_fallthru
    _
  // Predicated region
  $region14: #{res_block_down_pallas.4} parent=0 // pred_check
    _
  $region15: #{res_block_down_pallas.4} parent=0 // pred_check_branch
    %286 = sbr.rel (0) target = $region17
  $region16: #{res_block_down_pallas.4} parent=0 // pred_region
    _
  $region17: #{res_block_down_pallas.4} parent=0 // pred_fallthru
    _
  // Predicated region
  $region18: #{res_block_down_pallas.4} parent=0 // pred_check
    _
  $region19: #{res_block_down_pallas.4} parent=0 // pred_check_branch
    %288 = sbr.rel (0) target = $region21
  $region20: #{res_block_down_pallas.4} parent=0 // pred_region
    _
  $region21: #{res_block_down_pallas.4} parent=0 // pred_fallthru
    _
  // Predicated region
  $region22: #{res_block_down_pallas.4} parent=0 // pred_check
    _
  $region23: #{res_block_down_pallas.4} parent=0 // pred_check_branch
    %290 = sbr.rel (0) target = $region25
  $region24: #{res_block_down_pallas.4} parent=0 // pred_region
    _
  $region25: #{res_block_down_pallas.4} parent=0 // pred_fallthru
    _

// kernel: res_block_down_pallas.3
$region0: #{res_block_down_pallas.3}
  #allocation0 [shape = 'u32[]', space=smem, size = 0x4, offset = 0x4, fixed_abs, tag = 'smem constant byte address 0x4 - core index']
  #allocation1 [shape = 'u32[72,128]{1,0:T(1,128)}', space=vmem, size = 0x9000, scoped, tag = 'internal scratch']
  %s0 = inlined_call_operand.vmem [shape: bf16[128,128], index: 0, kind: input, shape index: {}]
  %s1 = inlined_call_operand.vmem [shape: bf16[128,128], index: 1, kind: input, shape index: {}]
  %s2 = inlined_call_operand.vmem [shape: bf16[128,128], index: 2, kind: input, shape index: {}]
  %s3 = inlined_call_operand.vmem [shape: bf16[128,128], index: 3, kind: output, shape index: {0}]
  %s4 = inlined_call_operand.vmem [shape: bf16[128,128], index: 4, kind: output, shape index: {1}]
  %s5 = inlined_call_operand.vmem [shape: f32[1,2,128], index: 5, kind: output, shape index: {2}]
  %s6 = inlined_call_operand.vmem [shape: f32[1,2,128], index: 6, kind: output, shape index: {3}]
  %7 = xla_tuple %s3, %s4, %s5, %s6
  %s8 = sld [smem:[#allocation0]]
  $region46: #{res_block_down_pallas.3} parent=0
    _
  %s10 = ssub.s32 1, %s8
  %s11 = scalar_select 0, %s10, %s8
  // Predicated region
  $region2: #{res_block_down_pallas.3} parent=0 // pred_check
    _
  $region3: #{res_block_down_pallas.3} parent=0 // pred_check_branch
    %13 = sbr.rel (0) target = $region5
  $region4: #{res_block_down_pallas.3} parent=0 // pred_region
    _
  $region5: #{res_block_down_pallas.3} parent=0 // pred_fallthru
    _
  // Predicated region
  $region6: #{res_block_down_pallas.3} parent=0 // pred_check
    _
  $region7: #{res_block_down_pallas.3} parent=0 // pred_check_branch
    %15 = sbr.rel (0) target = $region9
  $region8: #{res_block_down_pallas.3} parent=0 // pred_region
    _
  $region9: #{res_block_down_pallas.3} parent=0 // pred_fallthru
    _
  // Predicated region
  $region10: #{res_block_down_pallas.3} parent=0 // pred_check
    _
  $region11: #{res_block_down_pallas.3} parent=0 // pred_check_branch
    %17 = sbr.rel (0) target = $region13
  $region12: #{res_block_down_pallas.3} parent=0 // pred_region
    _
  $region13: #{res_block_down_pallas.3} parent=0 // pred_fallthru
    _
  %v18 = vld [vmem:[%s0] sm:$0xf]
  %v19 = vld [vmem:[%s0 + $0x4] sm:$0xf]
  %v20 = vld [vmem:[%s0 + $0x8] sm:$0xf]
  %v21 = vld [vmem:[%s0 + $0xc] sm:$0xf]
  %v22 = vld [vmem:[%s0 + $0x10] sm:$0xf]
  %v23 = vld [vmem:[%s0 + $0x14] sm:$0xf]
  %v24 = vld [vmem:[%s0 + $0x18] sm:$0xf]
  %v25 = vld [vmem:[%s0 + $0x1c] sm:$0xf]
  %v26 = vld [vmem:[%s0 + $0x20] sm:$0xf]
  %v27 = vld [vmem:[%s0 + $0x24] sm:$0xf]
  %v28 = vld [vmem:[%s0 + $0x28] sm:$0xf]
  %v29 = vld [vmem:[%s0 + $0x2c] sm:$0xf]
  %v30 = vld [vmem:[%s0 + $0x30] sm:$0xf]
  %v31 = vld [vmem:[%s0 + $0x34] sm:$0xf]
  %v32 = vld [vmem:[%s0 + $0x38] sm:$0xf]
  %v33 = vld [vmem:[%s0 + $0x3c] sm:$0xf]
  %v34 = vld [vmem:[%s1] sm:$0xf]
  %v35 = vld [vmem:[%s1 + $0x4] sm:$0xf]
  %v36 = vld [vmem:[%s1 + $0x8] sm:$0xf]
  %v37 = vld [vmem:[%s1 + $0xc] sm:$0xf]
  %v38 = vld [vmem:[%s1 + $0x10] sm:$0xf]
  %v39 = vld [vmem:[%s1 + $0x14] sm:$0xf]
  %v40 = vld [vmem:[%s1 + $0x18] sm:$0xf]
  %v41 = vld [vmem:[%s1 + $0x1c] sm:$0xf]
  %v42 = vld [vmem:[%s1 + $0x20] sm:$0xf]
  %v43 = vld [vmem:[%s1 + $0x24] sm:$0xf]
  %v44 = vld [vmem:[%s1 + $0x28] sm:$0xf]
  %v45 = vld [vmem:[%s1 + $0x2c] sm:$0xf]
  %v46 = vld [vmem:[%s1 + $0x30] sm:$0xf]
  %v47 = vld [vmem:[%s1 + $0x34] sm:$0xf]
  %v48 = vld [vmem:[%s1 + $0x38] sm:$0xf]
  %v49 = vld [vmem:[%s1 + $0x3c] sm:$0xf]
  %v66 = vunpack.c.l.b16 %v18
  %v67 = vunpack.c.l.b16 %v19
  %v68 = vunpack.c.l.b16 %v20
  %v69 = vunpack.c.l.b16 %v21
  %v70 = vunpack.c.l.b16 %v22
  %v71 = vunpack.c.l.b16 %v23
  %v72 = vunpack.c.l.b16 %v24
  %v73 = vunpack.c.l.b16 %v25
  %v74 = vunpack.c.l.b16 %v26
  %v75 = vunpack.c.l.b16 %v27
  %v76 = vunpack.c.l.b16 %v28
  %v77 = vunpack.c.l.b16 %v29
  %v78 = vunpack.c.l.b16 %v30
  %v79 = vunpack.c.l.b16 %v31
  %v80 = vunpack.c.l.b16 %v32
  %v81 = vunpack.c.l.b16 %v33
  %v82 = vpack.c.b16 %v67, %v66
  %v83 = vpack.c.b16 %v69, %v68
  %v84 = vpack.c.b16 %v71, %v70
  %v85 = vpack.c.b16 %v73, %v72
  %v86 = vpack.c.b16 %v75, %v74
  %v87 = vpack.c.b16 %v77, %v76
  %v88 = vpack.c.b16 %v79, %v78
  %v89 = vpack.c.b16 %v81, %v80
  %v114 = vunpack.c.l.b16 %v34
  %v115 = vunpack.c.l.b16 %v35
  %v116 = vunpack.c.l.b16 %v36
  %v117 = vunpack.c.l.b16 %v37
  %v118 = vunpack.c.l.b16 %v38
  %v119 = vunpack.c.l.b16 %v39
  %v120 = vunpack.c.l.b16 %v40
  %v121 = vunpack.c.l.b16 %v41
  %v122 = vunpack.c.l.b16 %v42
  %v123 = vunpack.c.l.b16 %v43
  %v124 = vunpack.c.l.b16 %v44
  %v125 = vunpack.c.l.b16 %v45
  %v126 = vunpack.c.l.b16 %v46
  %v127 = vunpack.c.l.b16 %v47
  %v128 = vunpack.c.l.b16 %v48
  %v129 = vunpack.c.l.b16 %v49
  %v130 = vpack.c.b16 %v115, %v114
  %v131 = vpack.c.b16 %v117, %v116
  %v132 = vpack.c.b16 %v119, %v118
  %v133 = vpack.c.b16 %v121, %v120
  %v134 = vpack.c.b16 %v123, %v122
  %v135 = vpack.c.b16 %v125, %v124
  %v136 = vpack.c.b16 %v127, %v126
  %v137 = vpack.c.b16 %v129, %v128
  %146 = vmatpush.bf16.msra.mxu0 %v137
  %147 = vmatpush.bf16.msra.mxu0 %v136
  %148 = vmatpush.bf16.msra.mxu0 %v135
  %149 = vmatpush.bf16.msra.mxu0 %v134
  %150 = vmatpush.bf16.msra.mxu0 %v133
  %151 = vmatpush.bf16.msra.mxu0 %v132
  %152 = vmatpush.bf16.msra.mxu0 %v131
  %153 = vmatpush.bf16.msra.mxu0 %v130
  %154 = vmatmul.bf16.gmra.mxu0 %v82
  %v155 = vpop.f32.mrf.mxu0
  %v156 = vadd.f32 0.0, %v155
  %v157 = vpop.f32.mrf.mxu0
  %v158 = vadd.f32 0.0, %v157
  %159 = vmatmul.bf16.gmra.mxu0 %v83
  %v160 = vpop.f32.mrf.mxu0
  %v161 = vadd.f32 0.0, %v160
  %v162 = vpop.f32.mrf.mxu0
  %v163 = vadd.f32 0.0, %v162
  %164 = vmatmul.bf16.gmra.mxu0 %v84
  %v165 = vpop.f32.mrf.mxu0
  %v166 = vadd.f32 0.0, %v165
  %v167 = vpop.f32.mrf.mxu0
  %v168 = vadd.f32 0.0, %v167
  %169 = vmatmul.bf16.gmra.mxu0 %v85
  %v170 = vpop.f32.mrf.mxu0
  %v171 = vadd.f32 0.0, %v170
  %v172 = vpop.f32.mrf.mxu0
  %v173 = vadd.f32 0.0, %v172
  %174 = vmatmul.bf16.gmra.mxu0 %v86
  %v175 = vpop.f32.mrf.mxu0
  %v176 = vadd.f32 0.0, %v175
  %v177 = vpop.f32.mrf.mxu0
  %v178 = vadd.f32 0.0, %v177
  %179 = vmatmul.bf16.gmra.mxu0 %v87
  %v180 = vpop.f32.mrf.mxu0
  %v181 = vadd.f32 0.0, %v180
  %v182 = vpop.f32.mrf.mxu0
  %v183 = vadd.f32 0.0, %v182
  %184 = vmatmul.bf16.gmra.mxu0 %v88
  %v185 = vpop.f32.mrf.mxu0
  %v186 = vadd.f32 0.0, %v185
  %v187 = vpop.f32.mrf.mxu0
  %v188 = vadd.f32 0.0, %v187
  %189 = vmatmul.bf16.gmra.mxu0 %v89
  %v190 = vpop.f32.mrf.mxu0
  %v191 = vadd.f32 0.0, %v190
  %v192 = vpop.f32.mrf.mxu0
  %v193 = vadd.f32 0.0, %v192
  %194 = vdwg.mxu0
  %v195 = vpack.c.bf16 %v156, %v156
  %v196 = vpack.c.bf16 %v158, %v158
  %v197 = vpack.c.bf16 %v161, %v161
  %v198 = vpack.c.bf16 %v163, %v163
  %v199 = vpack.c.bf16 %v166, %v166
  %v200 = vpack.c.bf16 %v168, %v168
  %v201 = vpack.c.bf16 %v171, %v171
  %v202 = vpack.c.bf16 %v173, %v173
  %v203 = vpack.c.bf16 %v176, %v176
  %v204 = vpack.c.bf16 %v178, %v178
  %v205 = vpack.c.bf16 %v181, %v181
  %v206 = vpack.c.bf16 %v183, %v183
  %v207 = vpack.c.bf16 %v186, %v186
  %v208 = vpack.c.bf16 %v188, %v188
  %v209 = vpack.c.bf16 %v191, %v191
  %v210 = vpack.c.bf16 %v193, %v193
  %211 = vst [vmem:[%s3] sm:$0xf] %v195
  %212 = vst [vmem:[%s3 + $0x4] sm:$0xf] %v196
  %213 = vst [vmem:[%s3 + $0x8] sm:$0xf] %v197
  %214 = vst [vmem:[%s3 + $0xc] sm:$0xf] %v198
  %215 = vst [vmem:[%s3 + $0x10] sm:$0xf] %v199
  %216 = vst [vmem:[%s3 + $0x14] sm:$0xf] %v200
  %217 = vst [vmem:[%s3 + $0x18] sm:$0xf] %v201
  %218 = vst [vmem:[%s3 + $0x1c] sm:$0xf] %v202
  %219 = vst [vmem:[%s3 + $0x20] sm:$0xf] %v203
  %220 = vst [vmem:[%s3 + $0x24] sm:$0xf] %v204
  %221 = vst [vmem:[%s3 + $0x28] sm:$0xf] %v205
  %222 = vst [vmem:[%s3 + $0x2c] sm:$0xf] %v206
  %223 = vst [vmem:[%s3 + $0x30] sm:$0xf] %v207
  %224 = vst [vmem:[%s3 + $0x34] sm:$0xf] %v208
  %225 = vst [vmem:[%s3 + $0x38] sm:$0xf] %v209
  %226 = vst [vmem:[%s3 + $0x3c] sm:$0xf] %v210
  %v227 = vadd.f32 %v156, %v158
  %v228 = vadd.f32 %v227, %v161
  %v229 = vadd.f32 %v228, %v163
  %v230 = vadd.f32 %v229, %v166
  %v231 = vadd.f32 %v230, %v168
  %v232 = vadd.f32 %v231, %v171
  %v233 = vadd.f32 %v232, %v173
  %v234 = vadd.f32 %v233, %v176
  %v235 = vadd.f32 %v234, %v178
  %v236 = vadd.f32 %v235, %v181
  %v237 = vadd.f32 %v236, %v183
  %v238 = vadd.f32 %v237, %v186
  %v239 = vadd.f32 %v238, %v188
  %v240 = vadd.f32 %v239, %v191
  %v241 = vadd.f32 %v240, %v193
  %v242 = vrot.slane %v241, 4
  %v243 = vadd.f32 %v241, %v242
  %v244 = vrot.slane %v243, 2
  %v245 = vadd.f32 %v243, %v244
  %v246 = vrot.slane %v245, 1
  %v247 = vadd.f32 %v245, %v246
  %v248 = vmul.f32 %v156, %v156
  %v249 = vmul.f32 %v158, %v158
  %v250 = vmul.f32 %v161, %v161
  %v251 = vmul.f32 %v163, %v163
  %v252 = vmul.f32 %v166, %v166
  %v253 = vmul.f32 %v168, %v168
  %v254 = vmul.f32 %v171, %v171
  %v255 = vmul.f32 %v173, %v173
  %v256 = vmul.f32 %v176, %v176
  %v257 = vmul.f32 %v178, %v178
  %v258 = vmul.f32 %v181, %v181
  %v259 = vmul.f32 %v183, %v183
  %v260 = vmul.f32 %v186, %v186
  %v261 = vmul.f32 %v188, %v188
  %v262 = vmul.f32 %v191, %v191
  %v263 = vmul.f32 %v193, %v193
  %v264 = vadd.f32 %v248, %v249
  %v265 = vadd.f32 %v264, %v250
  %v266 = vadd.f32 %v265, %v251
  %v267 = vadd.f32 %v266, %v252
  %v268 = vadd.f32 %v267, %v253
  %v269 = vadd.f32 %v268, %v254
  %v270 = vadd.f32 %v269, %v255
  %v271 = vadd.f32 %v270, %v256
  %v272 = vadd.f32 %v271, %v257
  %v273 = vadd.f32 %v272, %v258
  %v274 = vadd.f32 %v273, %v259
  %v275 = vadd.f32 %v274, %v260
  %v276 = vadd.f32 %v275, %v261
  %v277 = vadd.f32 %v276, %v262
  %v278 = vadd.f32 %v277, %v263
  %v279 = vrot.slane %v278, 4
  %v280 = vadd.f32 %v278, %v279
  %v281 = vrot.slane %v280, 2
  %v282 = vadd.f32 %v280, %v281
  %v283 = vrot.slane %v282, 1
  %v284 = vadd.f32 %v282, %v283
  %vm285 = vcmask 1040384
  %v286 = vsel %vm285, %v247, %v284
  %287 = vst [vmem:[%s5] sm:$0x3] %v286
  %v288 = vld [vmem:[%s2] sm:$0xf]
  %v289 = vld [vmem:[%s2 + $0x4] sm:$0xf]
  %v290 = vld [vmem:[%s2 + $0x8] sm:$0xf]
  %v291 = vld [vmem:[%s2 + $0xc] sm:$0xf]
  %v292 = vld [vmem:[%s2 + $0x10] sm:$0xf]
  %v293 = vld [vmem:[%s2 + $0x14] sm:$0xf]
  %v294 = vld [vmem:[%s2 + $0x18] sm:$0xf]
  %v295 = vld [vmem:[%s2 + $0x1c] sm:$0xf]
  %v296 = vld [vmem:[%s2 + $0x20] sm:$0xf]
  %v297 = vld [vmem:[%s2 + $0x24] sm:$0xf]
  %v298 = vld [vmem:[%s2 + $0x28] sm:$0xf]
  %v299 = vld [vmem:[%s2 + $0x2c] sm:$0xf]
  %v300 = vld [vmem:[%s2 + $0x30] sm:$0xf]
  %v301 = vld [vmem:[%s2 + $0x34] sm:$0xf]
  %v302 = vld [vmem:[%s2 + $0x38] sm:$0xf]
  %v303 = vld [vmem:[%s2 + $0x3c] sm:$0xf]
  %v320 = vunpack.c.l.b16 %v288
  %v321 = vunpack.c.l.b16 %v289
  %v322 = vunpack.c.l.b16 %v290
  %v323 = vunpack.c.l.b16 %v291
  %v324 = vunpack.c.l.b16 %v292
  %v325 = vunpack.c.l.b16 %v293
  %v326 = vunpack.c.l.b16 %v294
  %v327 = vunpack.c.l.b16 %v295
  %v328 = vunpack.c.l.b16 %v296
  %v329 = vunpack.c.l.b16 %v297
  %v330 = vunpack.c.l.b16 %v298
  %v331 = vunpack.c.l.b16 %v299
  %v332 = vunpack.c.l.b16 %v300
  %v333 = vunpack.c.l.b16 %v301
  %v334 = vunpack.c.l.b16 %v302
  %v335 = vunpack.c.l.b16 %v303
  %v336 = vpack.c.b16 %v321, %v320
  %v337 = vpack.c.b16 %v323, %v322
  %v338 = vpack.c.b16 %v325, %v324
  %v339 = vpack.c.b16 %v327, %v326
  %v340 = vpack.c.b16 %v329, %v328
  %v341 = vpack.c.b16 %v331, %v330
  %v342 = vpack.c.b16 %v333, %v332
  %v343 = vpack.c.b16 %v335, %v334
  %352 = vmatpush.bf16.msra.mxu0 %v343
  %353 = vmatpush.bf16.msra.mxu0 %v342
  %354 = vmatpush.bf16.msra.mxu0 %v341
  %355 = vmatpush.bf16.msra.mxu0 %v340
  %356 = vmatpush.bf16.msra.mxu0 %v339
  %357 = vmatpush.bf16.msra.mxu0 %v338
  %358 = vmatpush.bf16.msra.mxu0 %v337
  %359 = vmatpush.bf16.msra.mxu0 %v336
  %360 = vmatmul.bf16.gmra.mxu0 %v82
  %v361 = vpop.f32.mrf.mxu0
  %v362 = vadd.f32 0.0, %v361
  %v363 = vpop.f32.mrf.mxu0
  %v364 = vadd.f32 0.0, %v363
  %365 = vmatmul.bf16.gmra.mxu0 %v83
  %v366 = vpop.f32.mrf.mxu0
  %v367 = vadd.f32 0.0, %v366
  %v368 = vpop.f32.mrf.mxu0
  %v369 = vadd.f32 0.0, %v368
  %370 = vmatmul.bf16.gmra.mxu0 %v84
  %v371 = vpop.f32.mrf.mxu0
  %v372 = vadd.f32 0.0, %v371
  %v373 = vpop.f32.mrf.mxu0
  %v374 = vadd.f32 0.0, %v373
  %375 = vmatmul.bf16.gmra.mxu0 %v85
  %v376 = vpop.f32.mrf.mxu0
  %v377 = vadd.f32 0.0, %v376
  %v378 = vpop.f32.mrf.mxu0
  %v379 = vadd.f32 0.0, %v378
  %380 = vmatmul.bf16.gmra.mxu0 %v86
  %v381 = vpop.f32.mrf.mxu0
  %v382 = vadd.f32 0.0, %v381
  %v383 = vpop.f32.mrf.mxu0
  %v384 = vadd.f32 0.0, %v383
  %385 = vmatmul.bf16.gmra.mxu0 %v87
  %v386 = vpop.f32.mrf.mxu0
  %v387 = vadd.f32 0.0, %v386
  %v388 = vpop.f32.mrf.mxu0
  %v389 = vadd.f32 0.0, %v388
  %390 = vmatmul.bf16.gmra.mxu0 %v88
  %v391 = vpop.f32.mrf.mxu0
  %v392 = vadd.f32 0.0, %v391
  %v393 = vpop.f32.mrf.mxu0
  %v394 = vadd.f32 0.0, %v393
  %395 = vmatmul.bf16.gmra.mxu0 %v89
  %v396 = vpop.f32.mrf.mxu0
  %v397 = vadd.f32 0.0, %v396
  %v398 = vpop.f32.mrf.mxu0
  %v399 = vadd.f32 0.0, %v398
  %400 = vdwg.mxu0
  %v401 = vpack.c.bf16 %v362, %v362
  %v402 = vpack.c.bf16 %v364, %v364
  %v403 = vpack.c.bf16 %v367, %v367
  %v404 = vpack.c.bf16 %v369, %v369
  %v405 = vpack.c.bf16 %v372, %v372
  %v406 = vpack.c.bf16 %v374, %v374
  %v407 = vpack.c.bf16 %v377, %v377
  %v408 = vpack.c.bf16 %v379, %v379
  %v409 = vpack.c.bf16 %v382, %v382
  %v410 = vpack.c.bf16 %v384, %v384
  %v411 = vpack.c.bf16 %v387, %v387
  %v412 = vpack.c.bf16 %v389, %v389
  %v413 = vpack.c.bf16 %v392, %v392
  %v414 = vpack.c.bf16 %v394, %v394
  %v415 = vpack.c.bf16 %v397, %v397
  %v416 = vpack.c.bf16 %v399, %v399
  %417 = vst [vmem:[%s4] sm:$0xf] %v401
  %418 = vst [vmem:[%s4 + $0x4] sm:$0xf] %v402
  %419 = vst [vmem:[%s4 + $0x8] sm:$0xf] %v403
  %420 = vst [vmem:[%s4 + $0xc] sm:$0xf] %v404
  %421 = vst [vmem:[%s4 + $0x10] sm:$0xf] %v405
  %422 = vst [vmem:[%s4 + $0x14] sm:$0xf] %v406
  %423 = vst [vmem:[%s4 + $0x18] sm:$0xf] %v407
  %424 = vst [vmem:[%s4 + $0x1c] sm:$0xf] %v408
  %425 = vst [vmem:[%s4 + $0x20] sm:$0xf] %v409
  %426 = vst [vmem:[%s4 + $0x24] sm:$0xf] %v410
  %427 = vst [vmem:[%s4 + $0x28] sm:$0xf] %v411
  %428 = vst [vmem:[%s4 + $0x2c] sm:$0xf] %v412
  %429 = vst [vmem:[%s4 + $0x30] sm:$0xf] %v413
  %430 = vst [vmem:[%s4 + $0x34] sm:$0xf] %v414
  %431 = vst [vmem:[%s4 + $0x38] sm:$0xf] %v415
  %432 = vst [vmem:[%s4 + $0x3c] sm:$0xf] %v416
  %v433 = vadd.f32 %v362, %v364
  %v434 = vadd.f32 %v433, %v367
  %v435 = vadd.f32 %v434, %v369
  %v436 = vadd.f32 %v435, %v372
  %v437 = vadd.f32 %v436, %v374
  %v438 = vadd.f32 %v437, %v377
  %v439 = vadd.f32 %v438, %v379
  %v440 = vadd.f32 %v439, %v382
  %v441 = vadd.f32 %v440, %v384
  %v442 = vadd.f32 %v441, %v387
  %v443 = vadd.f32 %v442, %v389
  %v444 = vadd.f32 %v443, %v392
  %v445 = vadd.f32 %v444, %v394
  %v446 = vadd.f32 %v445, %v397
  %v447 = vadd.f32 %v446, %v399
  %v448 = vrot.slane %v447, 4
  %v449 = vadd.f32 %v447, %v448
  %v450 = vrot.slane %v449, 2
  %v451 = vadd.f32 %v449, %v450
  %v452 = vrot.slane %v451, 1
  %v453 = vadd.f32 %v451, %v452
  %v454 = vmul.f32 %v362, %v362
  %v455 = vmul.f32 %v364, %v364
  %v456 = vmul.f32 %v367, %v367
  %v457 = vmul.f32 %v369, %v369
  %v458 = vmul.f32 %v372, %v372
  %v459 = vmul.f32 %v374, %v374
  %v460 = vmul.f32 %v377, %v377
  %v461 = vmul.f32 %v379, %v379
  %v462 = vmul.f32 %v382, %v382
  %v463 = vmul.f32 %v384, %v384
  %v464 = vmul.f32 %v387, %v387
  %v465 = vmul.f32 %v389, %v389
  %v466 = vmul.f32 %v392, %v392
  %v467 = vmul.f32 %v394, %v394
  %v468 = vmul.f32 %v397, %v397
  %v469 = vmul.f32 %v399, %v399
  %v470 = vadd.f32 %v454, %v455
  %v471 = vadd.f32 %v470, %v456
  %v472 = vadd.f32 %v471, %v457
  %v473 = vadd.f32 %v472, %v458
  %v474 = vadd.f32 %v473, %v459
  %v475 = vadd.f32 %v474, %v460
  %v476 = vadd.f32 %v475, %v461
  %v477 = vadd.f32 %v476, %v462
  %v478 = vadd.f32 %v477, %v463
  %v479 = vadd.f32 %v478, %v464
  %v480 = vadd.f32 %v479, %v465
  %v481 = vadd.f32 %v480, %v466
  %v482 = vadd.f32 %v481, %v467
  %v483 = vadd.f32 %v482, %v468
  %v484 = vadd.f32 %v483, %v469
  %v485 = vrot.slane %v484, 4
  %v486 = vadd.f32 %v484, %v485
  %v487 = vrot.slane %v486, 2
  %v488 = vadd.f32 %v486, %v487
  %v489 = vrot.slane %v488, 1
  %v490 = vadd.f32 %v488, %v489
  %v491 = vsel %vm285, %v453, %v490
  %492 = vst [vmem:[%s6] sm:$0x3] %v491
  // Predicated region
  $region14: #{res_block_down_pallas.3} parent=0 // pred_check
    _
  $region15: #{res_block_down_pallas.3} parent=0 // pred_check_branch
    %494 = sbr.rel (0) target = $region17
  $region16: #{res_block_down_pallas.3} parent=0 // pred_region
    _
  $region17: #{res_block_down_pallas.3} parent=0 // pred_fallthru
    _
  // Predicated region
  $region18: #{res_block_down_pallas.3} parent=0 // pred_check
    _
  $region19: #{res_block_down_pallas.3} parent=0 // pred_check_branch
    %496 = sbr.rel (0) target = $region21
  $region20: #{res_block_down_pallas.3} parent=0 // pred_region
    _
  $region21: #{res_block_down_pallas.3} parent=0 // pred_fallthru
    _
  // Predicated region
  $region22: #{res_block_down_pallas.3} parent=0 // pred_check
    _
  $region23: #{res_block_down_pallas.3} parent=0 // pred_check_branch
    %498 = sbr.rel (0) target = $region25
  $region24: #{res_block_down_pallas.3} parent=0 // pred_region
    _
  $region25: #{res_block_down_pallas.3} parent=0 // pred_fallthru
    _
  // Predicated region
  $region26: #{res_block_down_pallas.3} parent=0 // pred_check
    _
  $region27: #{res_block_down_pallas.3} parent=0 // pred_check_branch
    %500 = sbr.rel (0) target = $region29
  $region28: #{res_block_down_pallas.3} parent=0 // pred_region
    _
  $region29: #{res_block_down_pallas.3} parent=0 // pred_fallthru
    _
  // Predicated region
  $region30: #{res_block_down_pallas.3} parent=0 // pred_check
    _
  $region31: #{res_block_down_pallas.3} parent=0 // pred_check_branch
    %502 = sbr.rel (0) target = $region33
  $region32: #{res_block_down_pallas.3} parent=0 // pred_region
    _
  $region33: #{res_block_down_pallas.3} parent=0 // pred_fallthru
    _
  // Predicated region
  $region34: #{res_block_down_pallas.3} parent=0 // pred_check
    _
  $region35: #{res_block_down_pallas.3} parent=0 // pred_check_branch
    %504 = sbr.rel (0) target = $region37
  $region36: #{res_block_down_pallas.3} parent=0 // pred_region
    _
  $region37: #{res_block_down_pallas.3} parent=0 // pred_fallthru
    _
  // Predicated region
  $region38: #{res_block_down_pallas.3} parent=0 // pred_check
    _
  $region39: #{res_block_down_pallas.3} parent=0 // pred_check_branch
    %506 = sbr.rel (0) target = $region41
  $region40: #{res_block_down_pallas.3} parent=0 // pred_region
    _
  $region41: #{res_block_down_pallas.3} parent=0 // pred_fallthru
    _
  // Predicated region
  $region42: #{res_block_down_pallas.3} parent=0 // pred_check
    _
  $region43: #{res_block_down_pallas.3} parent=0 // pred_check_branch
    %508 = sbr.rel (0) target = $region45
  $region44: #{res_block_down_pallas.3} parent=0 // pred_region
    _
  $region45: #{res_block_down_pallas.3} parent=0 // pred_fallthru
    _

// kernel: res_block_down_pallas.5
$region0: #{res_block_down_pallas.5}
  #allocation0 [shape = 'u32[]', space=smem, size = 0x4, offset = 0x4, fixed_abs, tag = 'smem constant byte address 0x4 - core index']
  #allocation1 [shape = 'u32[72,128]{1,0:T(1,128)}', space=vmem, size = 0x9000, scoped, tag = 'internal scratch']
  %s0 = inlined_call_operand.vmem [shape: bf16[128,128], index: 0, kind: input, shape index: {}]
  %s1 = inlined_call_operand.vmem [shape: bf16[128,128], index: 1, kind: input, shape index: {}]
  %s2 = inlined_call_operand.vmem [shape: f32[4,128], index: 2, kind: input, shape index: {}]
  %s3 = inlined_call_operand.vmem [shape: f32[128,128], index: 3, kind: output, shape index: {}]
  %s4 = sld [smem:[#allocation0]]
  $region22: #{res_block_down_pallas.5} parent=0
    _
  %s6 = ssub.s32 1, %s4
  %s7 = scalar_select 0, %s6, %s4
  // Predicated region
  $region2: #{res_block_down_pallas.5} parent=0 // pred_check
    _
  $region3: #{res_block_down_pallas.5} parent=0 // pred_check_branch
    %9 = sbr.rel (0) target = $region5
  $region4: #{res_block_down_pallas.5} parent=0 // pred_region
    _
  $region5: #{res_block_down_pallas.5} parent=0 // pred_fallthru
    _
  // Predicated region
  $region6: #{res_block_down_pallas.5} parent=0 // pred_check
    _
  $region7: #{res_block_down_pallas.5} parent=0 // pred_check_branch
    %11 = sbr.rel (0) target = $region9
  $region8: #{res_block_down_pallas.5} parent=0 // pred_region
    _
  $region9: #{res_block_down_pallas.5} parent=0 // pred_fallthru
    _
  // Predicated region
  $region10: #{res_block_down_pallas.5} parent=0 // pred_check
    _
  $region11: #{res_block_down_pallas.5} parent=0 // pred_check_branch
    %13 = sbr.rel (0) target = $region13
  $region12: #{res_block_down_pallas.5} parent=0 // pred_region
    _
  $region13: #{res_block_down_pallas.5} parent=0 // pred_fallthru
    _
  %v14 = vld [vmem:[%s0] sm:$0xf]
  %v15 = vld [vmem:[%s0 + $0x4] sm:$0xf]
  %v16 = vld [vmem:[%s0 + $0x8] sm:$0xf]
  %v17 = vld [vmem:[%s0 + $0xc] sm:$0xf]
  %v18 = vld [vmem:[%s0 + $0x10] sm:$0xf]
  %v19 = vld [vmem:[%s0 + $0x14] sm:$0xf]
  %v20 = vld [vmem:[%s0 + $0x18] sm:$0xf]
  %v21 = vld [vmem:[%s0 + $0x1c] sm:$0xf]
  %v22 = vld [vmem:[%s0 + $0x20] sm:$0xf]
  %v23 = vld [vmem:[%s0 + $0x24] sm:$0xf]
  %v24 = vld [vmem:[%s0 + $0x28] sm:$0xf]
  %v25 = vld [vmem:[%s0 + $0x2c] sm:$0xf]
  %v26 = vld [vmem:[%s0 + $0x30] sm:$0xf]
  %v27 = vld [vmem:[%s0 + $0x34] sm:$0xf]
  %v28 = vld [vmem:[%s0 + $0x38] sm:$0xf]
  %v29 = vld [vmem:[%s0 + $0x3c] sm:$0xf]
  %v30 = vunpack.c.l.bf16 %v14
  %v31 = vunpack.c.l.bf16 %v15
  %v32 = vunpack.c.l.bf16 %v16
  %v33 = vunpack.c.l.bf16 %v17
  %v34 = vunpack.c.l.bf16 %v18
  %v35 = vunpack.c.l.bf16 %v19
  %v36 = vunpack.c.l.bf16 %v20
  %v37 = vunpack.c.l.bf16 %v21
  %v38 = vunpack.c.l.bf16 %v22
  %v39 = vunpack.c.l.bf16 %v23
  %v40 = vunpack.c.l.bf16 %v24
  %v41 = vunpack.c.l.bf16 %v25
  %v42 = vunpack.c.l.bf16 %v26
  %v43 = vunpack.c.l.bf16 %v27
  %v44 = vunpack.c.l.bf16 %v28
  %v45 = vunpack.c.l.bf16 %v29
  %v46 = vld [vmem:[%s2] sm:$0x1]
  %v47 = vperm.slane %v46, 0
  %v48 = vmul.f32 %v30, %v47
  %v49 = vmul.f32 %v31, %v47
  %v50 = vmul.f32 %v32, %v47
  %v51 = vmul.f32 %v33, %v47
  %v52 = vmul.f32 %v34, %v47
  %v53 = vmul.f32 %v35, %v47
  %v54 = vmul.f32 %v36, %v47
  %v55 = vmul.f32 %v37, %v47
  %v56 = vmul.f32 %v38, %v47
  %v57 = vmul.f32 %v39, %v47
  %v58 = vmul.f32 %v40, %v47
  %v59 = vmul.f32 %v41, %v47
  %v60 = vmul.f32 %v42, %v47
  %v61 = vmul.f32 %v43, %v47
  %v62 = vmul.f32 %v44, %v47
  %v63 = vmul.f32 %v45, %v47
  %v64 = vld [vmem:[%s2 + $0x1] sm:$0x1]
  %v65 = vperm.slane %v64, 0
  %v66 = vadd.f32 %v48, %v65
  %v67 = vadd.f32 %v49, %v65
  %v68 = vadd.f32 %v50, %v65
  %v69 = vadd.f32 %v51, %v65
  %v70 = vadd.f32 %v52, %v65
  %v71 = vadd.f32 %v53, %v65
  %v72 = vadd.f32 %v54, %v65
  %v73 = vadd.f32 %v55, %v65
  %v74 = vadd.f32 %v56, %v65
  %v75 = vadd.f32 %v57, %v65
  %v76 = vadd.f32 %v58, %v65
  %v77 = vadd.f32 %v59, %v65
  %v78 = vadd.f32 %v60, %v65
  %v79 = vadd.f32 %v61, %v65
  %v80 = vadd.f32 %v62, %v65
  %v81 = vadd.f32 %v63, %v65
  %v82 = vld [vmem:[%s1] sm:$0xf]
  %v83 = vld [vmem:[%s1 + $0x4] sm:$0xf]
  %v84 = vld [vmem:[%s1 + $0x8] sm:$0xf]
  %v85 = vld [vmem:[%s1 + $0xc] sm:$0xf]
  %v86 = vld [vmem:[%s1 + $0x10] sm:$0xf]
  %v87 = vld [vmem:[%s1 + $0x14] sm:$0xf]
  %v88 = vld [vmem:[%s1 + $0x18] sm:$0xf]
  %v89 = vld [vmem:[%s1 + $0x1c] sm:$0xf]
  %v90 = vld [vmem:[%s1 + $0x20] sm:$0xf]
  %v91 = vld [vmem:[%s1 + $0x24] sm:$0xf]
  %v92 = vld [vmem:[%s1 + $0x28] sm:$0xf]
  %v93 = vld [vmem:[%s1 + $0x2c] sm:$0xf]
  %v94 = vld [vmem:[%s1 + $0x30] sm:$0xf]
  %v95 = vld [vmem:[%s1 + $0x34] sm:$0xf]
  %v96 = vld [vmem:[%s1 + $0x38] sm:$0xf]
  %v97 = vld [vmem:[%s1 + $0x3c] sm:$0xf]
  %v98 = vunpack.c.l.bf16 %v82
  %v99 = vunpack.c.l.bf16 %v83
  %v100 = vunpack.c.l.bf16 %v84
  %v101 = vunpack.c.l.bf16 %v85
  %v102 = vunpack.c.l.bf16 %v86
  %v103 = vunpack.c.l.bf16 %v87
  %v104 = vunpack.c.l.bf16 %v88
  %v105 = vunpack.c.l.bf16 %v89
  %v106 = vunpack.c.l.bf16 %v90
  %v107 = vunpack.c.l.bf16 %v91
  %v108 = vunpack.c.l.bf16 %v92
  %v109 = vunpack.c.l.bf16 %v93
  %v110 = vunpack.c.l.bf16 %v94
  %v111 = vunpack.c.l.bf16 %v95
  %v112 = vunpack.c.l.bf16 %v96
  %v113 = vunpack.c.l.bf16 %v97
  %v114 = vld [vmem:[%s2 + $0x2] sm:$0x1]
  %v115 = vperm.slane %v114, 0
  %v116 = vmul.f32 %v98, %v115
  %v117 = vmul.f32 %v99, %v115
  %v118 = vmul.f32 %v100, %v115
  %v119 = vmul.f32 %v101, %v115
  %v120 = vmul.f32 %v102, %v115
  %v121 = vmul.f32 %v103, %v115
  %v122 = vmul.f32 %v104, %v115
  %v123 = vmul.f32 %v105, %v115
  %v124 = vmul.f32 %v106, %v115
  %v125 = vmul.f32 %v107, %v115
  %v126 = vmul.f32 %v108, %v115
  %v127 = vmul.f32 %v109, %v115
  %v128 = vmul.f32 %v110, %v115
  %v129 = vmul.f32 %v111, %v115
  %v130 = vmul.f32 %v112, %v115
  %v131 = vmul.f32 %v113, %v115
  %v132 = vld [vmem:[%s2 + $0x3] sm:$0x1]
  %v133 = vperm.slane %v132, 0
  %v134 = vadd.f32 %v116, %v133
  %v135 = vadd.f32 %v117, %v133
  %v136 = vadd.f32 %v118, %v133
  %v137 = vadd.f32 %v119, %v133
  %v138 = vadd.f32 %v120, %v133
  %v139 = vadd.f32 %v121, %v133
  %v140 = vadd.f32 %v122, %v133
  %v141 = vadd.f32 %v123, %v133
  %v142 = vadd.f32 %v124, %v133
  %v143 = vadd.f32 %v125, %v133
  %v144 = vadd.f32 %v126, %v133
  %v145 = vadd.f32 %v127, %v133
  %v146 = vadd.f32 %v128, %v133
  %v147 = vadd.f32 %v129, %v133
  %v148 = vadd.f32 %v130, %v133
  %v149 = vadd.f32 %v131, %v133
  %vm150 = vcmp.ge.f32.partialorder %v66, 0.0
  %vm151 = vcmp.ge.f32.partialorder %v67, 0.0
  %vm152 = vcmp.ge.f32.partialorder %v68, 0.0
  %vm153 = vcmp.ge.f32.partialorder %v69, 0.0
  %vm154 = vcmp.ge.f32.partialorder %v70, 0.0
  %vm155 = vcmp.ge.f32.partialorder %v71, 0.0
  %vm156 = vcmp.ge.f32.partialorder %v72, 0.0
  %vm157 = vcmp.ge.f32.partialorder %v73, 0.0
  %vm158 = vcmp.ge.f32.partialorder %v74, 0.0
  %vm159 = vcmp.ge.f32.partialorder %v75, 0.0
  %vm160 = vcmp.ge.f32.partialorder %v76, 0.0
  %vm161 = vcmp.ge.f32.partialorder %v77, 0.0
  %vm162 = vcmp.ge.f32.partialorder %v78, 0.0
  %vm163 = vcmp.ge.f32.partialorder %v79, 0.0
  %vm164 = vcmp.ge.f32.partialorder %v80, 0.0
  %vm165 = vcmp.ge.f32.partialorder %v81, 0.0
  %v166 = vmul.f32 %v66, 0.2
  %v167 = vmul.f32 %v67, 0.2
  %v168 = vmul.f32 %v68, 0.2
  %v169 = vmul.f32 %v69, 0.2
  %v170 = vmul.f32 %v70, 0.2
  %v171 = vmul.f32 %v71, 0.2
  %v172 = vmul.f32 %v72, 0.2
  %v173 = vmul.f32 %v73, 0.2
  %v174 = vmul.f32 %v74, 0.2
  %v175 = vmul.f32 %v75, 0.2
  %v176 = vmul.f32 %v76, 0.2
  %v177 = vmul.f32 %v77, 0.2
  %v178 = vmul.f32 %v78, 0.2
  %v179 = vmul.f32 %v79, 0.2
  %v180 = vmul.f32 %v80, 0.2
  %v181 = vmul.f32 %v81, 0.2
  %v182 = vsel %vm150, %v66, %v166
  %v183 = vsel %vm151, %v67, %v167
  %v184 = vsel %vm152, %v68, %v168
  %v185 = vsel %vm153, %v69, %v169
  %v186 = vsel %vm154, %v70, %v170
  %v187 = vsel %vm155, %v71, %v171
  %v188 = vsel %vm156, %v72, %v172
  %v189 = vsel %vm157, %v73, %v173
  %v190 = vsel %vm158, %v74, %v174
  %v191 = vsel %vm159, %v75, %v175
  %v192 = vsel %vm160, %v76, %v176
  %v193 = vsel %vm161, %v77, %v177
  %v194 = vsel %vm162, %v78, %v178
  %v195 = vsel %vm163, %v79, %v179
  %v196 = vsel %vm164, %v80, %v180
  %v197 = vsel %vm165, %v81, %v181
  %vm198 = vcmp.ge.f32.partialorder %v134, 0.0
  %vm199 = vcmp.ge.f32.partialorder %v135, 0.0
  %vm200 = vcmp.ge.f32.partialorder %v136, 0.0
  %vm201 = vcmp.ge.f32.partialorder %v137, 0.0
  %vm202 = vcmp.ge.f32.partialorder %v138, 0.0
  %vm203 = vcmp.ge.f32.partialorder %v139, 0.0
  %vm204 = vcmp.ge.f32.partialorder %v140, 0.0
  %vm205 = vcmp.ge.f32.partialorder %v141, 0.0
  %vm206 = vcmp.ge.f32.partialorder %v142, 0.0
  %vm207 = vcmp.ge.f32.partialorder %v143, 0.0
  %vm208 = vcmp.ge.f32.partialorder %v144, 0.0
  %vm209 = vcmp.ge.f32.partialorder %v145, 0.0
  %vm210 = vcmp.ge.f32.partialorder %v146, 0.0
  %vm211 = vcmp.ge.f32.partialorder %v147, 0.0
  %vm212 = vcmp.ge.f32.partialorder %v148, 0.0
  %vm213 = vcmp.ge.f32.partialorder %v149, 0.0
  %v214 = vmul.f32 %v134, 0.2
  %v215 = vmul.f32 %v135, 0.2
  %v216 = vmul.f32 %v136, 0.2
  %v217 = vmul.f32 %v137, 0.2
  %v218 = vmul.f32 %v138, 0.2
  %v219 = vmul.f32 %v139, 0.2
  %v220 = vmul.f32 %v140, 0.2
  %v221 = vmul.f32 %v141, 0.2
  %v222 = vmul.f32 %v142, 0.2
  %v223 = vmul.f32 %v143, 0.2
  %v224 = vmul.f32 %v144, 0.2
  %v225 = vmul.f32 %v145, 0.2
  %v226 = vmul.f32 %v146, 0.2
  %v227 = vmul.f32 %v147, 0.2
  %v228 = vmul.f32 %v148, 0.2
  %v229 = vmul.f32 %v149, 0.2
  %v230 = vsel %vm198, %v134, %v214
  %v231 = vsel %vm199, %v135, %v215
  %v232 = vsel %vm200, %v136, %v216
  %v233 = vsel %vm201, %v137, %v217
  %v234 = vsel %vm202, %v138, %v218
  %v235 = vsel %vm203, %v139, %v219
  %v236 = vsel %vm204, %v140, %v220
  %v237 = vsel %vm205, %v141, %v221
  %v238 = vsel %vm206, %v142, %v222
  %v239 = vsel %vm207, %v143, %v223
  %v240 = vsel %vm208, %v144, %v224
  %v241 = vsel %vm209, %v145, %v225
  %v242 = vsel %vm210, %v146, %v226
  %v243 = vsel %vm211, %v147, %v227
  %v244 = vsel %vm212, %v148, %v228
  %v245 = vsel %vm213, %v149, %v229
  %v246 = vadd.f32 %v182, %v230
  %v247 = vadd.f32 %v183, %v231
  %v248 = vadd.f32 %v184, %v232
  %v249 = vadd.f32 %v185, %v233
  %v250 = vadd.f32 %v186, %v234
  %v251 = vadd.f32 %v187, %v235
  %v252 = vadd.f32 %v188, %v236
  %v253 = vadd.f32 %v189, %v237
  %v254 = vadd.f32 %v190, %v238
  %v255 = vadd.f32 %v191, %v239
  %v256 = vadd.f32 %v192, %v240
  %v257 = vadd.f32 %v193, %v241
  %v258 = vadd.f32 %v194, %v242
  %v259 = vadd.f32 %v195, %v243
  %v260 = vadd.f32 %v196, %v244
  %v261 = vadd.f32 %v197, %v245
  %262 = vst [vmem:[%s3] sm:$0xff] %v246
  %263 = vst [vmem:[%s3 + $0x8] sm:$0xff] %v247
  %264 = vst [vmem:[%s3 + $0x10] sm:$0xff] %v248
  %265 = vst [vmem:[%s3 + $0x18] sm:$0xff] %v249
  %266 = vst [vmem:[%s3 + $0x20] sm:$0xff] %v250
  %267 = vst [vmem:[%s3 + $0x28] sm:$0xff] %v251
  %268 = vst [vmem:[%s3 + $0x30] sm:$0xff] %v252
  %269 = vst [vmem:[%s3 + $0x38] sm:$0xff] %v253
  %270 = vst [vmem:[%s3 + $0x40] sm:$0xff] %v254
  %271 = vst [vmem:[%s3 + $0x48] sm:$0xff] %v255
  %272 = vst [vmem:[%s3 + $0x50] sm:$0xff] %v256
  %273 = vst [vmem:[%s3 + $0x58] sm:$0xff] %v257
  %274 = vst [vmem:[%s3 + $0x60] sm:$0xff] %v258
  %275 = vst [vmem:[%s3 + $0x68] sm:$0xff] %v259
  %276 = vst [vmem:[%s3 + $0x70] sm:$0xff] %v260
  %277 = vst [vmem:[%s3 + $0x78] sm:$0xff] %v261
  // Predicated region
  $region14: #{res_block_down_pallas.5} parent=0 // pred_check
    _
  $region15: #{res_block_down_pallas.5} parent=0 // pred_check_branch
    %279 = sbr.rel (0) target = $region17
  $region16: #{res_block_down_pallas.5} parent=0 // pred_region
    _
  $region17: #{res_block_down_pallas.5} parent=0 // pred_fallthru
    _
  // Predicated region
  $region18: #{res_block_down_pallas.5} parent=0 // pred_check
    _
  $region19: #{res_block_down_pallas.5} parent=0 // pred_check_branch
    %281 = sbr.rel (0) target = $region21
  $region20: #{res_block_down_pallas.5} parent=0 // pred_region
    _
  $region21: #{res_block_down_pallas.5} parent=0 // pred_fallthru
    _

</llo_original>
